<compile_context>
chip_gen: v6e
topology: v6e:2x2x1
jax: 0.10.0
libtpu: 0.0.40
codegen_flags: <defaults>
</compile_context>

<pallas_src>
import functools

import jax
import jax.numpy as jnp
from jax.experimental import pallas as pl
from jax.experimental.pallas import tpu as pltpu

IN_FEATURES = 20
HIDDEN = 128          # hidden widths (100, 100, 50) zero-padded to one 128-lane group
OUT_FEATURES = 10


def _round_up(n, m):
    return ((n + m - 1) // m) * m


def _fc_m6_kernel(x_ref, w1_ref, b1_ref, w2_ref, b2_ref, w3_ref, b3_ref,
                  w4_ref, b4_ref, o_ref):
    wdt = w1_ref.dtype
    # fc1 + ReLU : (tm, 20) @ (20, 128)
    h = jnp.dot(x_ref[...], w1_ref[...], preferred_element_type=jnp.float32)
    h = jnp.maximum(h + b1_ref[...], 0.0)
    # fc2 + ReLU : (tm, 128) @ (128, 128)  (zero-padded rows/cols contribute 0)
    h = jnp.dot(h.astype(wdt), w2_ref[...], preferred_element_type=jnp.float32)
    h = jnp.maximum(h + b2_ref[...], 0.0)
    # fc3 + ReLU : (tm, 128) @ (128, 128)
    h = jnp.dot(h.astype(wdt), w3_ref[...], preferred_element_type=jnp.float32)
    h = jnp.maximum(h + b3_ref[...], 0.0)
    # fc4        : (tm, 128) @ (128, 10)  -> narrow lane-masked store, cheap
    o = jnp.dot(h.astype(wdt), w4_ref[...], preferred_element_type=jnp.float32)
    o_ref[...] = (o + b4_ref[...]).astype(o_ref.dtype)


def prepare_params(w1, b1, w2, b2, w3, b3, w4, b4, *, compute_dtype=jnp.float32):
    """One-time prep: transpose to (in, out) layout, zero-pad hidden dims to 128
    lanes (exact math), reshape biases to (1, out).  Biases stay f32; weights are
    cast to `compute_dtype` (bfloat16 is a cheap win on v5e — validate tolerance)."""

    def pad_w(w, rows, cols):
        w = jnp.asarray(w, jnp.float32)
        return jnp.zeros((rows, cols), jnp.float32).at[:w.shape[0], :w.shape[1]].set(w)

    def pad_b(b, cols):
        b = jnp.asarray(b, jnp.float32)
        return jnp.zeros((1, cols), jnp.float32).at[0, :b.shape[0]].set(b)

    w1_t = pad_w(jnp.asarray(w1).T, IN_FEATURES, HIDDEN)      # (20, 128)
    w2_t = pad_w(jnp.asarray(w2).T, HIDDEN, HIDDEN)           # (128, 128)
    w3_t = pad_w(jnp.asarray(w3).T, HIDDEN, HIDDEN)           # (128, 128)
    w4_t = pad_w(jnp.asarray(w4).T, HIDDEN, OUT_FEATURES)     # (128, 10)
    b1_r = pad_b(b1, HIDDEN)                                  # (1, 128)
    b2_r = pad_b(b2, HIDDEN)                                  # (1, 128)
    b3_r = pad_b(b3, HIDDEN)                                  # (1, 128)
    b4_r = jnp.asarray(b4, jnp.float32).reshape(1, OUT_FEATURES)  # (1, 10)

    cd = compute_dtype
    return (w1_t.astype(cd), b1_r, w2_t.astype(cd), b2_r,
            w3_t.astype(cd), b3_r, w4_t.astype(cd), b4_r)


def _pick_tile(B, block_rows):
    """Batch tile: multiple of 8 sublanes; >=2 grid steps for big batches (v7x TCs)."""
    block_rows = max(8, _round_up(block_rows, 8))
    if B <= block_rows:
        if B > 1024:
            # Split so grid >= 2 and "parallel" can shard across both v7x TensorCores.
            return _round_up(pl.cdiv(B, 2), 8)
        return B  # single full-extent block: always satisfies the (8,128) rule
    return block_rows


@functools.partial(jax.jit, static_argnames=("block_rows",))
def fc_m6_forward(x, params, *, block_rows=2048):
    """x: (B, 20); params: output of prepare_params(). Returns (B, 10) float32."""
    w1_t, b1_r, w2_t, b2_r, w3_t, b3_r, w4_t, b4_r = params
    B, D_in = x.shape
    x = x.astype(w1_t.dtype)

    tm = _pick_tile(B, block_rows)
    grid = (pl.cdiv(B, tm),)   # ragged tail handled by Pallas block masking (no host pad)

    const = lambda i: (0, 0)   # weights / biases stay VMEM-resident across grid steps

    return pl.pallas_call(
        _fc_m6_kernel,
        out_shape=jax.ShapeDtypeStruct((B, OUT_FEATURES), jnp.float32),
        grid=grid,
        in_specs=[
            pl.BlockSpec((tm, D_in), lambda i: (i, 0)),   # x: tiled over batch
            pl.BlockSpec(w1_t.shape, const),
            pl.BlockSpec(b1_r.shape, const),
            pl.BlockSpec(w2_t.shape, const),
            pl.BlockSpec(b2_r.shape, const),
            pl.BlockSpec(w3_t.shape, const),
            pl.BlockSpec(b3_r.shape, const),
            pl.BlockSpec(w4_t.shape, const),
            pl.BlockSpec(b4_r.shape, const),
        ],
        out_specs=pl.BlockSpec((tm, OUT_FEATURES), lambda i: (i, 0)),
        compiler_params=pltpu.CompilerParams(
            dimension_semantics=("parallel",),
        ),
    )(x, w1_t, b1_r, w2_t, b2_r, w3_t, b3_r, w4_t, b4_r)


def init_params(key):
    """torch.nn.Linear-style uniform(-1/sqrt(fan_in), 1/sqrt(fan_in)) init."""
    keys = jax.random.split(key, 8)

    def lin(kw, kb, fan_in, fan_out):
        bound = 1.0 / jnp.sqrt(float(fan_in))
        w = jax.random.uniform(kw, (fan_out, fan_in), jnp.float32, -bound, bound)
        b = jax.random.uniform(kb, (fan_out,), jnp.float32, -bound, bound)
        return w, b

    w1, b1 = lin(keys[0], keys[1], 20, 100)
    w2, b2 = lin(keys[2], keys[3], 100, 100)
    w3, b3 = lin(keys[4], keys[5], 100, 50)
    w4, b4 = lin(keys[6], keys[7], 50, 10)
    return w1, b1, w2, b2, w3, b3, w4, b4


if __name__ == "__main__":
    key = jax.random.PRNGKey(0)
    kx, kp = jax.random.split(key)

    B = 8
    x = jax.random.normal(kx, (B, IN_FEATURES), dtype=jnp.float32)
    w1, b1, w2, b2, w3, b3, w4, b4 = init_params(kp)

    params = prepare_params(w1, b1, w2, b2, w3, b3, w4, b4)
    out = fc_m6_forward(x, params)
    out = jax.block_until_ready(out)

    # Reference in plain JAX (matches the PyTorch forward).
    h = jnp.maximum(x @ w1.T + b1, 0.0)
    h = jnp.maximum(h @ w2.T + b2, 0.0)
    h = jnp.maximum(h @ w3.T + b3, 0.0)
    ref = h @ w4.T + b4

    assert out.shape == (B, OUT_FEATURES)
    assert jnp.allclose(out, ref, atol=1e-4, rtol=1e-4), float(jnp.max(jnp.abs(out - ref)))

    print("KERNEL_OK")
</pallas_src>

<mosaic_0001>
module attributes {stable_mosaic.version = 11 : i64} {
  func.func @_fc_m6_kernel(%arg0: i32, %arg1: memref<8x20xf32, #tpu.memory_space<vmem>>, %arg2: memref<20x128xf32, #tpu.memory_space<vmem>>, %arg3: memref<1x128xf32, #tpu.memory_space<vmem>>, %arg4: memref<128x128xf32, #tpu.memory_space<vmem>>, %arg5: memref<1x128xf32, #tpu.memory_space<vmem>>, %arg6: memref<128x128xf32, #tpu.memory_space<vmem>>, %arg7: memref<1x128xf32, #tpu.memory_space<vmem>>, %arg8: memref<128x10xf32, #tpu.memory_space<vmem>>, %arg9: memref<1x10xf32, #tpu.memory_space<vmem>>, %arg10: memref<8x10xf32, #tpu.memory_space<vmem>>) attributes {dimension_semantics = [#tpu.dimension_semantics<parallel>], iteration_bounds = array<i64: 1>, scalar_prefetch = 0 : i64, scratch_operands = 0 : i64, tpu.core_type = #tpu.core_type<tc>, window_params = [{transform_indices = @transform_0, window_bounds = array<i64: 8, 20>}, {pipeline_mode = #tpu.pipeline_mode<synchronous>, transform_indices = @transform_1, window_bounds = array<i64: 20, 128>}, {pipeline_mode = #tpu.pipeline_mode<synchronous>, transform_indices = @transform_2, window_bounds = array<i64: 1, 128>}, {pipeline_mode = #tpu.pipeline_mode<synchronous>, transform_indices = @transform_3, window_bounds = array<i64: 128, 128>}, {pipeline_mode = #tpu.pipeline_mode<synchronous>, transform_indices = @transform_4, window_bounds = array<i64: 1, 128>}, {pipeline_mode = #tpu.pipeline_mode<synchronous>, transform_indices = @transform_5, window_bounds = array<i64: 128, 128>}, {pipeline_mode = #tpu.pipeline_mode<synchronous>, transform_indices = @transform_6, window_bounds = array<i64: 1, 128>}, {pipeline_mode = #tpu.pipeline_mode<synchronous>, transform_indices = @transform_7, window_bounds = array<i64: 128, 10>}, {pipeline_mode = #tpu.pipeline_mode<synchronous>, transform_indices = @transform_8, window_bounds = array<i64: 1, 10>}, {transform_indices = @transform_9, window_bounds = array<i64: 8, 10>}]} {
    %c0 = arith.constant 0 : index
    %c0_0 = arith.constant 0 : index
    %0 = vector.load %arg1[%c0, %c0_0] : memref<8x20xf32, #tpu.memory_space<vmem>>, vector<8x20xf32>
    %c0_1 = arith.constant 0 : index
    %c0_2 = arith.constant 0 : index
    %1 = vector.load %arg2[%c0_1, %c0_2] : memref<20x128xf32, #tpu.memory_space<vmem>>, vector<20x128xf32>
    %cst = arith.constant dense<0.000000e+00> : vector<8x128xf32>
    %2 = tpu.matmul %0, %1, %cst {dimension_numbers = #tpu.dot_dimension_numbers<[1], [0], [0], [1], [0, 0, 1, 1], [], []>} : vector<8x20xf32>, vector<20x128xf32>, vector<8x128xf32> -> vector<8x128xf32>
    %c0_3 = arith.constant 0 : index
    %c0_4 = arith.constant 0 : index
    %3 = vector.load %arg3[%c0_3, %c0_4] : memref<1x128xf32, #tpu.memory_space<vmem>>, vector<1x128xf32>
    %4 = vector.broadcast %3 : vector<1x128xf32> to vector<8x128xf32>
    %5 = arith.addf %2, %4 : vector<8x128xf32>
    %cst_5 = arith.constant 0.000000e+00 : f32
    %6 = vector.broadcast %cst_5 : f32 to vector<8x128xf32>
    %7 = arith.maximumf %5, %6 : vector<8x128xf32>
    %c0_6 = arith.constant 0 : index
    %c0_7 = arith.constant 0 : index
    %8 = vector.load %arg4[%c0_6, %c0_7] : memref<128x128xf32, #tpu.memory_space<vmem>>, vector<128x128xf32>
    %cst_8 = arith.constant dense<0.000000e+00> : vector<8x128xf32>
    %9 = tpu.matmul %7, %8, %cst_8 {dimension_numbers = #tpu.dot_dimension_numbers<[1], [0], [0], [1], [0, 0, 1, 1], [], []>} : vector<8x128xf32>, vector<128x128xf32>, vector<8x128xf32> -> vector<8x128xf32>
    %c0_9 = arith.constant 0 : index
    %c0_10 = arith.constant 0 : index
    %10 = vector.load %arg5[%c0_9, %c0_10] : memref<1x128xf32, #tpu.memory_space<vmem>>, vector<1x128xf32>
    %11 = vector.broadcast %10 : vector<1x128xf32> to vector<8x128xf32>
    %12 = arith.addf %9, %11 : vector<8x128xf32>
    %cst_11 = arith.constant 0.000000e+00 : f32
    %13 = vector.broadcast %cst_11 : f32 to vector<8x128xf32>
    %14 = arith.maximumf %12, %13 : vector<8x128xf32>
    %c0_12 = arith.constant 0 : index
    %c0_13 = arith.constant 0 : index
    %15 = vector.load %arg6[%c0_12, %c0_13] : memref<128x128xf32, #tpu.memory_space<vmem>>, vector<128x128xf32>
    %cst_14 = arith.constant dense<0.000000e+00> : vector<8x128xf32>
    %16 = tpu.matmul %14, %15, %cst_14 {dimension_numbers = #tpu.dot_dimension_numbers<[1], [0], [0], [1], [0, 0, 1, 1], [], []>} : vector<8x128xf32>, vector<128x128xf32>, vector<8x128xf32> -> vector<8x128xf32>
    %c0_15 = arith.constant 0 : index
    %c0_16 = arith.constant 0 : index
    %17 = vector.load %arg7[%c0_15, %c0_16] : memref<1x128xf32, #tpu.memory_space<vmem>>, vector<1x128xf32>
    %18 = vector.broadcast %17 : vector<1x128xf32> to vector<8x128xf32>
    %19 = arith.addf %16, %18 : vector<8x128xf32>
    %cst_17 = arith.constant 0.000000e+00 : f32
    %20 = vector.broadcast %cst_17 : f32 to vector<8x128xf32>
    %21 = arith.maximumf %19, %20 : vector<8x128xf32>
    %c0_18 = arith.constant 0 : index
    %c0_19 = arith.constant 0 : index
    %22 = vector.load %arg8[%c0_18, %c0_19] : memref<128x10xf32, #tpu.memory_space<vmem>>, vector<128x10xf32>
    %cst_20 = arith.constant dense<0.000000e+00> : vector<8x10xf32>
    %23 = tpu.matmul %21, %22, %cst_20 {dimension_numbers = #tpu.dot_dimension_numbers<[1], [0], [0], [1], [0, 0, 1, 1], [], []>} : vector<8x128xf32>, vector<128x10xf32>, vector<8x10xf32> -> vector<8x10xf32>
    %c0_21 = arith.constant 0 : index
    %c0_22 = arith.constant 0 : index
    %24 = vector.load %arg9[%c0_21, %c0_22] : memref<1x10xf32, #tpu.memory_space<vmem>>, vector<1x10xf32>
    %25 = vector.broadcast %24 : vector<1x10xf32> to vector<8x10xf32>
    %26 = arith.addf %23, %25 : vector<8x10xf32>
    %c0_23 = arith.constant 0 : index
    %c0_24 = arith.constant 0 : index
    %27 = vector.load %arg10[%c0_23, %c0_24] : memref<8x10xf32, #tpu.memory_space<vmem>>, vector<8x10xf32>
    tpu.vector_store %arg10[%c0_23, %c0_24], %26 {strides = array<i32>} : memref<8x10xf32, #tpu.memory_space<vmem>>, vector<8x10xf32>,
    return
  }
  func.func @transform_0(%arg0: i32) -> (i32, i32) {
    %c0_i32 = arith.constant 0 : i32
    %c0_i32_0 = arith.constant 0 : i32
    return %arg0, %c0_i32 : i32, i32
  }
  func.func @transform_1(%arg0: i32) -> (i32, i32) {
    %c0_i32 = arith.constant 0 : i32
    %c0_i32_0 = arith.constant 0 : i32
    %c0_i32_1 = arith.constant 0 : i32
    return %c0_i32, %c0_i32_0 : i32, i32
  }
  func.func @transform_2(%arg0: i32) -> (i32, i32) {
    %c0_i32 = arith.constant 0 : i32
    %c0_i32_0 = arith.constant 0 : i32
    %c0_i32_1 = arith.constant 0 : i32
    return %c0_i32, %c0_i32_0 : i32, i32
  }
  func.func @transform_3(%arg0: i32) -> (i32, i32) {
    %c0_i32 = arith.constant 0 : i32
    %c0_i32_0 = arith.constant 0 : i32
    %c0_i32_1 = arith.constant 0 : i32
    return %c0_i32, %c0_i32_0 : i32, i32
  }
  func.func @transform_4(%arg0: i32) -> (i32, i32) {
    %c0_i32 = arith.constant 0 : i32
    %c0_i32_0 = arith.constant 0 : i32
    %c0_i32_1 = arith.constant 0 : i32
    return %c0_i32, %c0_i32_0 : i32, i32
  }
  func.func @transform_5(%arg0: i32) -> (i32, i32) {
    %c0_i32 = arith.constant 0 : i32
    %c0_i32_0 = arith.constant 0 : i32
    %c0_i32_1 = arith.constant 0 : i32
    return %c0_i32, %c0_i32_0 : i32, i32
  }
  func.func @transform_6(%arg0: i32) -> (i32, i32) {
    %c0_i32 = arith.constant 0 : i32
    %c0_i32_0 = arith.constant 0 : i32
    %c0_i32_1 = arith.constant 0 : i32
    return %c0_i32, %c0_i32_0 : i32, i32
  }
  func.func @transform_7(%arg0: i32) -> (i32, i32) {
    %c0_i32 = arith.constant 0 : i32
    %c0_i32_0 = arith.constant 0 : i32
    %c0_i32_1 = arith.constant 0 : i32
    return %c0_i32, %c0_i32_0 : i32, i32
  }
  func.func @transform_8(%arg0: i32) -> (i32, i32) {
    %c0_i32 = arith.constant 0 : i32
    %c0_i32_0 = arith.constant 0 : i32
    %c0_i32_1 = arith.constant 0 : i32
    return %c0_i32, %c0_i32_0 : i32, i32
  }
  func.func @transform_9(%arg0: i32) -> (i32, i32) {
    %c0_i32 = arith.constant 0 : i32
    %c0_i32_0 = arith.constant 0 : i32
    return %arg0, %c0_i32 : i32, i32
  }
}

</mosaic_0001>

<llo_original>
// kernel: fc_m6_forward.1
$region0: #{fc_m6_forward.1}
  #allocation0 [shape = 'u32[]', space=smem, size = 0x4, offset = 0x4, fixed_abs, tag = 'smem constant byte address 0x4 - core index']
  #allocation1 [shape = 'u32[144,128]{1,0:T(1,128)}', space=vmem, size = 0x12000, scoped, tag = 'internal scratch']
  %s0 = inlined_call_operand.vmem [shape: f32[8,20], index: 0, kind: input, shape index: {}]
  %s1 = inlined_call_operand.hbm [shape: f32[20,128], index: 1, kind: input, shape index: {}]
  %s2 = inlined_call_operand.vmem [shape: f32[1,128], index: 2, kind: input, shape index: {}]
  %s3 = inlined_call_operand.vmem [shape: f32[128,128], index: 3, kind: input, shape index: {}]
  %s4 = inlined_call_operand.vmem [shape: f32[1,128], index: 4, kind: input, shape index: {}]
  %s5 = inlined_call_operand.hbm [shape: f32[128,128], index: 5, kind: input, shape index: {}]
  %s6 = inlined_call_operand.vmem [shape: f32[1,128], index: 6, kind: input, shape index: {}]
  %s7 = inlined_call_operand.vmem [shape: f32[128,10], index: 7, kind: input, shape index: {}]
  %s8 = inlined_call_operand.vmem [shape: f32[1,10], index: 8, kind: input, shape index: {}]
  %s9 = inlined_call_operand.hbm [shape: f32[8,10], index: 9, kind: output, shape index: {}]
  %s10 = sld [smem:[#allocation0]]
  $region54: #{fc_m6_forward.1} parent=0
    _
  %s12 = ssub.s32 1, %s10
  %s13 = scalar_select 0, %s12, %s10
  $region1: #{fc_m6_forward.1} parent=0
    #allocation2 [shape = 'u8[12288]{0}', space=vmem, size = 0x3000, scoped, tag = 'input window, operand 1, single buffered']
    #allocation3 [shape = 's32[1]{0}', space=sflag, size = 0x4, scoped, tag = 'scoped memory for fc_m6_forward.1']
    #allocation4 [shape = 's32[1]{0}', space=sflag, size = 0x4, scoped, tag = 'scoped memory for fc_m6_forward.1']
    #allocation5 [shape = 'u8[65536]{0}', space=vmem, size = 0x10000, scoped, tag = 'input window, operand 5, single buffered']
    #allocation6 [shape = 's32[1]{0}', space=sflag, size = 0x4, scoped, tag = 'scoped memory for fc_m6_forward.1']
    #allocation7 [shape = 'u8[4096]{0}', space=vmem, size = 0x1000, scoped, tag = 'output window, operand 0, single buffered']
    %14 = vsyncpa [#allocation3], 0
    %15 = vsyncpa [#allocation6], 0
    %16 = vsyncpa [#allocation4], 0
    // Predicated region
    $region2: #{fc_m6_forward.1} parent=1 // pred_check
      _
    $region3: #{fc_m6_forward.1} parent=1 // pred_check_branch
      %18 = sbr.rel (0) target = $region5
    $region4: #{fc_m6_forward.1} parent=1 // pred_region
      _
    $region5: #{fc_m6_forward.1} parent=1 // pred_fallthru
      _
    // Predicated region
    $region6: #{fc_m6_forward.1} parent=1 // pred_check
      _
    $region7: #{fc_m6_forward.1} parent=1 // pred_check_branch
      %20 = sbr.rel (0) target = $region9
    $region8: #{fc_m6_forward.1} parent=1 // pred_region
      %s22 = ssub.s32 384, 384
      %23 = vsyncadd [#allocation3], %s22
      %s24 = sshll.u32 [#allocation2], 4
      %s25 = int_to_ptr.vmem [resolvable:$true] %s24
      %30 = dma.hbm_to_vmem [thread:$0]  %s1, 384, %s25, [#allocation3], 128, 128, 8
    $region9: #{fc_m6_forward.1} parent=1 // pred_fallthru
      _
    // Predicated region
    $region10: #{fc_m6_forward.1} parent=1 // pred_check
      _
    $region11: #{fc_m6_forward.1} parent=1 // pred_check_branch
      %32 = sbr.rel (0) target = $region13
    $region12: #{fc_m6_forward.1} parent=1 // pred_region
      _
    $region13: #{fc_m6_forward.1} parent=1 // pred_fallthru
      _
    // Predicated region
    $region14: #{fc_m6_forward.1} parent=1 // pred_check
      _
    $region15: #{fc_m6_forward.1} parent=1 // pred_check_branch
      %34 = sbr.rel (0) target = $region17
    $region16: #{fc_m6_forward.1} parent=1 // pred_region
      _
    $region17: #{fc_m6_forward.1} parent=1 // pred_fallthru
      _
    // Predicated region
    $region18: #{fc_m6_forward.1} parent=1 // pred_check
      _
    $region19: #{fc_m6_forward.1} parent=1 // pred_check_branch
      %36 = sbr.rel (0) target = $region21
    $region20: #{fc_m6_forward.1} parent=1 // pred_region
      _
    $region21: #{fc_m6_forward.1} parent=1 // pred_fallthru
      _
    // Predicated region
    $region22: #{fc_m6_forward.1} parent=1 // pred_check
      _
    $region23: #{fc_m6_forward.1} parent=1 // pred_check_branch
      %38 = sbr.rel (0) target = $region25
    $region24: #{fc_m6_forward.1} parent=1 // pred_region
      %s40 = ssub.s32 2048, 2048
      %41 = vsyncadd [#allocation6], %s40
      %s42 = sshll.u32 [#allocation5], 4
      %s43 = int_to_ptr.vmem [resolvable:$true] %s42
      %48 = dma.hbm_to_vmem [thread:$0]  %s5, 2048, %s43, [#allocation6], 128, 128, 8
    $region25: #{fc_m6_forward.1} parent=1 // pred_fallthru
      _
    // Predicated region
    $region26: #{fc_m6_forward.1} parent=1 // pred_check
      _
    $region27: #{fc_m6_forward.1} parent=1 // pred_check_branch
      %50 = sbr.rel (0) target = $region29
    $region28: #{fc_m6_forward.1} parent=1 // pred_region
      _
    $region29: #{fc_m6_forward.1} parent=1 // pred_fallthru
      _
    // Predicated region
    $region30: #{fc_m6_forward.1} parent=1 // pred_check
      _
    $region31: #{fc_m6_forward.1} parent=1 // pred_check_branch
      %52 = sbr.rel (0) target = $region33
    $region32: #{fc_m6_forward.1} parent=1 // pred_region
      _
    $region33: #{fc_m6_forward.1} parent=1 // pred_fallthru
      _
    // Predicated region
    $region34: #{fc_m6_forward.1} parent=1 // pred_check
      _
    $region35: #{fc_m6_forward.1} parent=1 // pred_check_branch
      %54 = sbr.rel (0) target = $region37
    $region36: #{fc_m6_forward.1} parent=1 // pred_region
      _
    $region37: #{fc_m6_forward.1} parent=1 // pred_fallthru
      _
    // Predicated region
    $region38: #{fc_m6_forward.1} parent=1 // pred_check
      _
    $region39: #{fc_m6_forward.1} parent=1 // pred_check_branch
      %56 = sbr.rel (0) target = $region41
    $region40: #{fc_m6_forward.1} parent=1 // pred_region
      %57 = dma.done [#allocation3], 384
    $region41: #{fc_m6_forward.1} parent=1 // pred_fallthru
      _
    // Predicated region
    $region42: #{fc_m6_forward.1} parent=1 // pred_check
      _
    $region43: #{fc_m6_forward.1} parent=1 // pred_check_branch
      %59 = sbr.rel (0) target = $region45
    $region44: #{fc_m6_forward.1} parent=1 // pred_region
      %60 = dma.done [#allocation6], 2048
    $region45: #{fc_m6_forward.1} parent=1 // pred_fallthru
      _
    %v61 = vld [vmem:[%s0] sm:$0xff]
    %v62 = vld [vmem:[#allocation2] sm:$0xff]
    %v63 = vld [vmem:[#allocation2 + $0x8] sm:$0xff]
    %v64 = vld [vmem:[#allocation2 + $0x10] sm:$0xf]
    %v65 = vld [vmem:[%s2] sm:$0x1]
    %v67 = vlaneseq
    %v68 = vshrl.u32 %v67, 7
    %v69 = vsub.s32 0, %v68
    %v70 = vrot.slane %v65, %v69
    %vm72 = vcmask 162816
    %v74 = vsel %vm72, %v61, 0
    %vm76 = vcmask 1043456
    %v78 = vsel %vm76, %v64, 0
    %80 = vmatprep.subr.mxu0 0.0
    %81 = vmatpush1.msra.mxu0 0.0
    %82 = vmatprep.subr.mxu0 0.0
    %83 = vmatpush1.msra.mxu0 0.0
    %84 = vmatprep.subr.mxu0 0.0
    %85 = vmatpush1.msra.mxu0 0.0
    %86 = vmatprep.subr.mxu0 0.0
    %87 = vmatpush1.msra.mxu0 0.0
    %88 = vmatprep.subr.mxu0 0.0
    %89 = vmatpush1.msra.mxu0 0.0
    %90 = vmatprep.subr.mxu0 0.0
    %91 = vmatpush1.msra.mxu0 0.0
    %92 = vmatprep.subr.mxu0 0.0
    %93 = vmatpush1.msra.mxu0 0.0
    %94 = vmatprep.subr.mxu0 0.0
    %95 = vmatpush1.msra.mxu0 0.0
    %96 = vmatprep.subr.mxu0 0.0
    %97 = vmatpush1.msra.mxu0 0.0
    %98 = vmatprep.subr.mxu0 0.0
    %99 = vmatpush1.msra.mxu0 0.0
    %100 = vmatprep.subr.mxu0 0.0
    %101 = vmatpush1.msra.mxu0 0.0
    %102 = vmatprep.subr.mxu0 0.0
    %103 = vmatpush1.msra.mxu0 0.0
    %104 = vmatprep.subr.mxu0 0.0
    %105 = vmatpush1.msra.mxu0 0.0
    %106 = vmatprep.subr.mxu0 0.0
    %107 = vmatpush1.msra.mxu0 %v78
    %108 = vmatprep.subr.mxu0 0.0
    %109 = vmatpush1.msra.mxu0 %v63
    %110 = vmatprep.subr.mxu0 0.0
    %111 = vmatpush1.msra.mxu0 %v62
    %112 = vmatprep.subr.mxu0 0.0
    %113 = vmatpush2.msra.mxu0 0.0
    %114 = vmatprep.subr.mxu0 0.0
    %115 = vmatpush2.msra.mxu0 0.0
    %116 = vmatprep.subr.mxu0 0.0
    %117 = vmatpush2.msra.mxu0 0.0
    %118 = vmatprep.subr.mxu0 0.0
    %119 = vmatpush2.msra.mxu0 0.0
    %120 = vmatprep.subr.mxu0 0.0
    %121 = vmatpush2.msra.mxu0 0.0
    %122 = vmatprep.subr.mxu0 0.0
    %123 = vmatpush2.msra.mxu0 0.0
    %124 = vmatprep.subr.mxu0 0.0
    %125 = vmatpush2.msra.mxu0 0.0
    %126 = vmatprep.subr.mxu0 0.0
    %127 = vmatpush2.msra.mxu0 0.0
    %128 = vmatprep.subr.mxu0 0.0
    %129 = vmatpush2.msra.mxu0 0.0
    %130 = vmatprep.subr.mxu0 0.0
    %131 = vmatpush2.msra.mxu0 0.0
    %132 = vmatprep.subr.mxu0 0.0
    %133 = vmatpush2.msra.mxu0 0.0
    %134 = vmatprep.subr.mxu0 0.0
    %135 = vmatpush2.msra.mxu0 0.0
    %136 = vmatprep.subr.mxu0 0.0
    %137 = vmatpush2.msra.mxu0 0.0
    %138 = vmatprep.subr.mxu0 0.0
    %139 = vmatpush2.msra.mxu0 0.0
    %140 = vmatprep.subr.mxu0 0.0
    %141 = vmatpush2.msra.mxu0 0.0
    %142 = vmatprep.subr.mxu0 0.0
    %143 = vmatpush2.msra.mxu0 0.0
    %144 = vmatprep.mubr.f32.mxu0 0.0
    %145 = vmatmul.mubr.f32.gmra.mxu0 %v74
    %v146 = vpop.f32.mrf.mxu0
    %v147 = vadd.f32 %v70, %v146
    %v148 = vpop.f32.mrf.mxu0
    %149 = vdwg.mxu0
    %v150 = vmax.f32 %v147, 0.0
    %v151 = vld [vmem:[%s3] sm:$0xff]
    %v152 = vld [vmem:[%s3 + $0x8] sm:$0xff]
    %v153 = vld [vmem:[%s3 + $0x10] sm:$0xff]
    %v154 = vld [vmem:[%s3 + $0x18] sm:$0xff]
    %v155 = vld [vmem:[%s3 + $0x20] sm:$0xff]
    %v156 = vld [vmem:[%s3 + $0x28] sm:$0xff]
    %v157 = vld [vmem:[%s3 + $0x30] sm:$0xff]
    %v158 = vld [vmem:[%s3 + $0x38] sm:$0xff]
    %v159 = vld [vmem:[%s3 + $0x40] sm:$0xff]
    %v160 = vld [vmem:[%s3 + $0x48] sm:$0xff]
    %v161 = vld [vmem:[%s3 + $0x50] sm:$0xff]
    %v162 = vld [vmem:[%s3 + $0x58] sm:$0xff]
    %v163 = vld [vmem:[%s3 + $0x60] sm:$0xff]
    %v164 = vld [vmem:[%s3 + $0x68] sm:$0xff]
    %v165 = vld [vmem:[%s3 + $0x70] sm:$0xff]
    %v166 = vld [vmem:[%s3 + $0x78] sm:$0xff]
    %v167 = vld [vmem:[%s4] sm:$0x1]
    %v169 = vlaneseq
    %v170 = vshrl.u32 %v169, 7
    %v171 = vsub.s32 0, %v170
    %v172 = vrot.slane %v167, %v171
    %174 = vmatprep.subr.mxu0 0.0
    %175 = vmatpush1.msra.mxu0 %v166
    %176 = vmatprep.subr.mxu0 0.0
    %177 = vmatpush1.msra.mxu0 %v165
    %178 = vmatprep.subr.mxu0 0.0
    %179 = vmatpush1.msra.mxu0 %v164
    %180 = vmatprep.subr.mxu0 0.0
    %181 = vmatpush1.msra.mxu0 %v163
    %182 = vmatprep.subr.mxu0 0.0
    %183 = vmatpush1.msra.mxu0 %v162
    %184 = vmatprep.subr.mxu0 0.0
    %185 = vmatpush1.msra.mxu0 %v161
    %186 = vmatprep.subr.mxu0 0.0
    %187 = vmatpush1.msra.mxu0 %v160
    %188 = vmatprep.subr.mxu0 0.0
    %189 = vmatpush1.msra.mxu0 %v159
    %190 = vmatprep.subr.mxu0 0.0
    %191 = vmatpush1.msra.mxu0 %v158
    %192 = vmatprep.subr.mxu0 0.0
    %193 = vmatpush1.msra.mxu0 %v157
    %194 = vmatprep.subr.mxu0 0.0
    %195 = vmatpush1.msra.mxu0 %v156
    %196 = vmatprep.subr.mxu0 0.0
    %197 = vmatpush1.msra.mxu0 %v155
    %198 = vmatprep.subr.mxu0 0.0
    %199 = vmatpush1.msra.mxu0 %v154
    %200 = vmatprep.subr.mxu0 0.0
    %201 = vmatpush1.msra.mxu0 %v153
    %202 = vmatprep.subr.mxu0 0.0
    %203 = vmatpush1.msra.mxu0 %v152
    %204 = vmatprep.subr.mxu0 0.0
    %205 = vmatpush1.msra.mxu0 %v151
    %206 = vmatprep.subr.mxu0 0.0
    %207 = vmatpush2.msra.mxu0 0.0
    %208 = vmatprep.subr.mxu0 0.0
    %209 = vmatpush2.msra.mxu0 0.0
    %210 = vmatprep.subr.mxu0 0.0
    %211 = vmatpush2.msra.mxu0 0.0
    %212 = vmatprep.subr.mxu0 0.0
    %213 = vmatpush2.msra.mxu0 0.0
    %214 = vmatprep.subr.mxu0 0.0
    %215 = vmatpush2.msra.mxu0 0.0
    %216 = vmatprep.subr.mxu0 0.0
    %217 = vmatpush2.msra.mxu0 0.0
    %218 = vmatprep.subr.mxu0 0.0
    %219 = vmatpush2.msra.mxu0 0.0
    %220 = vmatprep.subr.mxu0 0.0
    %221 = vmatpush2.msra.mxu0 0.0
    %222 = vmatprep.subr.mxu0 0.0
    %223 = vmatpush2.msra.mxu0 0.0
    %224 = vmatprep.subr.mxu0 0.0
    %225 = vmatpush2.msra.mxu0 0.0
    %226 = vmatprep.subr.mxu0 0.0
    %227 = vmatpush2.msra.mxu0 0.0
    %228 = vmatprep.subr.mxu0 0.0
    %229 = vmatpush2.msra.mxu0 0.0
    %230 = vmatprep.subr.mxu0 0.0
    %231 = vmatpush2.msra.mxu0 0.0
    %232 = vmatprep.subr.mxu0 0.0
    %233 = vmatpush2.msra.mxu0 0.0
    %234 = vmatprep.subr.mxu0 0.0
    %235 = vmatpush2.msra.mxu0 0.0
    %236 = vmatprep.subr.mxu0 0.0
    %237 = vmatpush2.msra.mxu0 0.0
    %238 = vmatprep.mubr.f32.mxu0 0.0
    %239 = vmatmul.mubr.f32.gmra.mxu0 %v150
    %v240 = vpop.f32.mrf.mxu0
    %v241 = vadd.f32 %v172, %v240
    %v242 = vpop.f32.mrf.mxu0
    %243 = vdwg.mxu0
    %v244 = vmax.f32 %v241, 0.0
    %v245 = vld [vmem:[#allocation5] sm:$0xff]
    %v246 = vld [vmem:[#allocation5 + $0x8] sm:$0xff]
    %v247 = vld [vmem:[#allocation5 + $0x10] sm:$0xff]
    %v248 = vld [vmem:[#allocation5 + $0x18] sm:$0xff]
    %v249 = vld [vmem:[#allocation5 + $0x20] sm:$0xff]
    %v250 = vld [vmem:[#allocation5 + $0x28] sm:$0xff]
    %v251 = vld [vmem:[#allocation5 + $0x30] sm:$0xff]
    %v252 = vld [vmem:[#allocation5 + $0x38] sm:$0xff]
    %v253 = vld [vmem:[#allocation5 + $0x40] sm:$0xff]
    %v254 = vld [vmem:[#allocation5 + $0x48] sm:$0xff]
    %v255 = vld [vmem:[#allocation5 + $0x50] sm:$0xff]
    %v256 = vld [vmem:[#allocation5 + $0x58] sm:$0xff]
    %v257 = vld [vmem:[#allocation5 + $0x60] sm:$0xff]
    %v258 = vld [vmem:[#allocation5 + $0x68] sm:$0xff]
    %v259 = vld [vmem:[#allocation5 + $0x70] sm:$0xff]
    %v260 = vld [vmem:[#allocation5 + $0x78] sm:$0xff]
    %v261 = vld [vmem:[%s6] sm:$0x1]
    %v263 = vlaneseq
    %v264 = vshrl.u32 %v263, 7
    %v265 = vsub.s32 0, %v264
    %v266 = vrot.slane %v261, %v265
    %268 = vmatprep.subr.mxu0 0.0
    %269 = vmatpush1.msra.mxu0 %v260
    %270 = vmatprep.subr.mxu0 0.0
    %271 = vmatpush1.msra.mxu0 %v259
    %272 = vmatprep.subr.mxu0 0.0
    %273 = vmatpush1.msra.mxu0 %v258
    %274 = vmatprep.subr.mxu0 0.0
    %275 = vmatpush1.msra.mxu0 %v257
    %276 = vmatprep.subr.mxu0 0.0
    %277 = vmatpush1.msra.mxu0 %v256
    %278 = vmatprep.subr.mxu0 0.0
    %279 = vmatpush1.msra.mxu0 %v255
    %280 = vmatprep.subr.mxu0 0.0
    %281 = vmatpush1.msra.mxu0 %v254
    %282 = vmatprep.subr.mxu0 0.0
    %283 = vmatpush1.msra.mxu0 %v253
    %284 = vmatprep.subr.mxu0 0.0
    %285 = vmatpush1.msra.mxu0 %v252
    %286 = vmatprep.subr.mxu0 0.0
    %287 = vmatpush1.msra.mxu0 %v251
    %288 = vmatprep.subr.mxu0 0.0
    %289 = vmatpush1.msra.mxu0 %v250
    %290 = vmatprep.subr.mxu0 0.0
    %291 = vmatpush1.msra.mxu0 %v249
    %292 = vmatprep.subr.mxu0 0.0
    %293 = vmatpush1.msra.mxu0 %v248
    %294 = vmatprep.subr.mxu0 0.0
    %295 = vmatpush1.msra.mxu0 %v247
    %296 = vmatprep.subr.mxu0 0.0
    %297 = vmatpush1.msra.mxu0 %v246
    %298 = vmatprep.subr.mxu0 0.0
    %299 = vmatpush1.msra.mxu0 %v245
    %300 = vmatprep.subr.mxu0 0.0
    %301 = vmatpush2.msra.mxu0 0.0
    %302 = vmatprep.subr.mxu0 0.0
    %303 = vmatpush2.msra.mxu0 0.0
    %304 = vmatprep.subr.mxu0 0.0
    %305 = vmatpush2.msra.mxu0 0.0
    %306 = vmatprep.subr.mxu0 0.0
    %307 = vmatpush2.msra.mxu0 0.0
    %308 = vmatprep.subr.mxu0 0.0
    %309 = vmatpush2.msra.mxu0 0.0
    %310 = vmatprep.subr.mxu0 0.0
    %311 = vmatpush2.msra.mxu0 0.0
    %312 = vmatprep.subr.mxu0 0.0
    %313 = vmatpush2.msra.mxu0 0.0
    %314 = vmatprep.subr.mxu0 0.0
    %315 = vmatpush2.msra.mxu0 0.0
    %316 = vmatprep.subr.mxu0 0.0
    %317 = vmatpush2.msra.mxu0 0.0
    %318 = vmatprep.subr.mxu0 0.0
    %319 = vmatpush2.msra.mxu0 0.0
    %320 = vmatprep.subr.mxu0 0.0
    %321 = vmatpush2.msra.mxu0 0.0
    %322 = vmatprep.subr.mxu0 0.0
    %323 = vmatpush2.msra.mxu0 0.0
    %324 = vmatprep.subr.mxu0 0.0
    %325 = vmatpush2.msra.mxu0 0.0
    %326 = vmatprep.subr.mxu0 0.0
    %327 = vmatpush2.msra.mxu0 0.0
    %328 = vmatprep.subr.mxu0 0.0
    %329 = vmatpush2.msra.mxu0 0.0
    %330 = vmatprep.subr.mxu0 0.0
    %331 = vmatpush2.msra.mxu0 0.0
    %332 = vmatprep.mubr.f32.mxu0 0.0
    %333 = vmatmul.mubr.f32.gmra.mxu0 %v244
    %v334 = vpop.f32.mrf.mxu0
    %v335 = vadd.f32 %v266, %v334
    %v336 = vpop.f32.mrf.mxu0
    %337 = vdwg.mxu0
    %v338 = vmax.f32 %v335, 0.0
    %v339 = vld [vmem:[%s7] sm:$0xff]
    %v340 = vld [vmem:[%s7 + $0x8] sm:$0xff]
    %v341 = vld [vmem:[%s7 + $0x10] sm:$0xff]
    %v342 = vld [vmem:[%s7 + $0x18] sm:$0xff]
    %v343 = vld [vmem:[%s7 + $0x20] sm:$0xff]
    %v344 = vld [vmem:[%s7 + $0x28] sm:$0xff]
    %v345 = vld [vmem:[%s7 + $0x30] sm:$0xff]
    %v346 = vld [vmem:[%s7 + $0x38] sm:$0xff]
    %v347 = vld [vmem:[%s7 + $0x40] sm:$0xff]
    %v348 = vld [vmem:[%s7 + $0x48] sm:$0xff]
    %v349 = vld [vmem:[%s7 + $0x50] sm:$0xff]
    %v350 = vld [vmem:[%s7 + $0x58] sm:$0xff]
    %v351 = vld [vmem:[%s7 + $0x60] sm:$0xff]
    %v352 = vld [vmem:[%s7 + $0x68] sm:$0xff]
    %v353 = vld [vmem:[%s7 + $0x70] sm:$0xff]
    %v354 = vld [vmem:[%s7 + $0x78] sm:$0xff]
    %v355 = vld [vmem:[%s8] sm:$0x1]
    %v357 = vlaneseq
    %v358 = vshrl.u32 %v357, 7
    %v359 = vsub.s32 0, %v358
    %v360 = vrot.slane %v355, %v359
    %362 = vmatprep.subr.mxu0 0.0
    %363 = vmatpush1.msra.mxu0 %v354
    %364 = vmatprep.subr.mxu0 0.0
    %365 = vmatpush1.msra.mxu0 %v353
    %366 = vmatprep.subr.mxu0 0.0
    %367 = vmatpush1.msra.mxu0 %v352
    %368 = vmatprep.subr.mxu0 0.0
    %369 = vmatpush1.msra.mxu0 %v351
    %370 = vmatprep.subr.mxu0 0.0
    %371 = vmatpush1.msra.mxu0 %v350
    %372 = vmatprep.subr.mxu0 0.0
    %373 = vmatpush1.msra.mxu0 %v349
    %374 = vmatprep.subr.mxu0 0.0
    %375 = vmatpush1.msra.mxu0 %v348
    %376 = vmatprep.subr.mxu0 0.0
    %377 = vmatpush1.msra.mxu0 %v347
    %378 = vmatprep.subr.mxu0 0.0
    %379 = vmatpush1.msra.mxu0 %v346
    %380 = vmatprep.subr.mxu0 0.0
    %381 = vmatpush1.msra.mxu0 %v345
    %382 = vmatprep.subr.mxu0 0.0
    %383 = vmatpush1.msra.mxu0 %v344
    %384 = vmatprep.subr.mxu0 0.0
    %385 = vmatpush1.msra.mxu0 %v343
    %386 = vmatprep.subr.mxu0 0.0
    %387 = vmatpush1.msra.mxu0 %v342
    %388 = vmatprep.subr.mxu0 0.0
    %389 = vmatpush1.msra.mxu0 %v341
    %390 = vmatprep.subr.mxu0 0.0
    %391 = vmatpush1.msra.mxu0 %v340
    %392 = vmatprep.subr.mxu0 0.0
    %393 = vmatpush1.msra.mxu0 %v339
    %394 = vmatprep.subr.mxu0 0.0
    %395 = vmatpush2.msra.mxu0 0.0
    %396 = vmatprep.subr.mxu0 0.0
    %397 = vmatpush2.msra.mxu0 0.0
    %398 = vmatprep.subr.mxu0 0.0
    %399 = vmatpush2.msra.mxu0 0.0
    %400 = vmatprep.subr.mxu0 0.0
    %401 = vmatpush2.msra.mxu0 0.0
    %402 = vmatprep.subr.mxu0 0.0
    %403 = vmatpush2.msra.mxu0 0.0
    %404 = vmatprep.subr.mxu0 0.0
    %405 = vmatpush2.msra.mxu0 0.0
    %406 = vmatprep.subr.mxu0 0.0
    %407 = vmatpush2.msra.mxu0 0.0
    %408 = vmatprep.subr.mxu0 0.0
    %409 = vmatpush2.msra.mxu0 0.0
    %410 = vmatprep.subr.mxu0 0.0
    %411 = vmatpush2.msra.mxu0 0.0
    %412 = vmatprep.subr.mxu0 0.0
    %413 = vmatpush2.msra.mxu0 0.0
    %414 = vmatprep.subr.mxu0 0.0
    %415 = vmatpush2.msra.mxu0 0.0
    %416 = vmatprep.subr.mxu0 0.0
    %417 = vmatpush2.msra.mxu0 0.0
    %418 = vmatprep.subr.mxu0 0.0
    %419 = vmatpush2.msra.mxu0 0.0
    %420 = vmatprep.subr.mxu0 0.0
    %421 = vmatpush2.msra.mxu0 0.0
    %422 = vmatprep.subr.mxu0 0.0
    %423 = vmatpush2.msra.mxu0 0.0
    %424 = vmatprep.subr.mxu0 0.0
    %425 = vmatpush2.msra.mxu0 0.0
    %426 = vmatprep.mubr.f32.mxu0 0.0
    %427 = vmatmul.mubr.f32.gmra.mxu0 %v338
    %v428 = vpop.f32.mrf.mxu0
    %v429 = vadd.f32 %v360, %v428
    %v430 = vpop.f32.mrf.mxu0
    %431 = vdwg.mxu0
    %vm432 = vcmask 80896
    %433 = vst.msk [vmem:[#allocation7] sm:$0xff] %vm432, %v429
    // Predicated region
    $region46: #{fc_m6_forward.1} parent=1 // pred_check
      _
    $region47: #{fc_m6_forward.1} parent=1 // pred_check_branch
      %435 = sbr.rel (0) target = $region49
    $region48: #{fc_m6_forward.1} parent=1 // pred_region
      %s437 = ssub.s32 128, 128
      %438 = vsyncadd [#allocation4], %s437
      %s440 = sshll.u32 [#allocation7], 4
      %s441 = int_to_ptr.vmem [resolvable:$true] %s440
      %443 = dma.vmem_to_hbm [thread:$0]  %s441, 128, %s9, [#allocation4]
    $region49: #{fc_m6_forward.1} parent=1 // pred_fallthru
      _
    // Predicated region
    $region50: #{fc_m6_forward.1} parent=1 // pred_check
      _
    $region51: #{fc_m6_forward.1} parent=1 // pred_check_branch
      %445 = sbr.rel (0) target = $region53
    $region52: #{fc_m6_forward.1} parent=1 // pred_region
      %446 = dma.done [#allocation4], 128
    $region53: #{fc_m6_forward.1} parent=1 // pred_fallthru
      _
    %447 = vsyncpa [#allocation3], 1
    %448 = vsyncpa [#allocation6], 1
    %449 = vsyncpa [#allocation4], 1

</llo_original>
